<compile_context>
chip_gen: v7x
topology: tpu7x:2x2x1
jax: 0.10.0
libtpu: 0.0.40
codegen_flags: <defaults>
</compile_context>

<pallas_src>
import functools

import jax
import jax.numpy as jnp
from jax.experimental import pallas as pl
from jax.experimental.pallas import tpu as pltpu


def _round_up(x, m):
    return ((x + m - 1) // m) * m


def _pick_tile(m_out, cout_p, k, cin, *, prefer_multiple_tiles=False):
    """Largest multiple-of-128 divisor of m_out satisfying the vreg / scratch bounds."""
    # Keep the (CoutP, TM) f32 matmul result within ~32 vregs (128 KiB) so it never
    # spills to VMEM, and keep the (K, TM) + (Cin, TM+halo) bf16 staging buffers modest.
    reg_bound = max(128, ((128 * 1024) // (4 * cout_p)) // 128 * 128)
    slab_bound = max(128, ((2 * 2 ** 20) // (2 * (k + cin))) // 128 * 128)
    tm_cap = min(reg_bound, slab_bound, 2048)
    divisors = [d for d in range(128, m_out + 1, 128) if m_out % d == 0 and d <= tm_cap]
    if not divisors:
        return 128
    divisors.sort()
    tm = divisors[-1]
    # With a single batch element, make sure the mt axis has >= 2 tiles so the v7x
    # megacore has something to shard.
    if prefer_multiple_tiles and tm == m_out and len(divisors) > 1:
        tm = divisors[-2]
    return tm


# ----------------------------------------------------------------------------
# Pallas kernel: one (batch element, M-tile) per grid step.
#   x_ref     : (1, Cin, L)      flattened zero-padded image (bf16), resident per batch
#   w_ref     : (CoutP, K)       BN-scale-folded weights, K = KH*KW*Cin (bf16), resident
#   shift_ref : (CoutP, 1) f32   folded BN shift = beta - mean * gamma/sqrt(var+eps)
#   o_ref     : (1, CoutP, TM)   lane-dense bf16 output tile
#   win_ref   : (Cin, TM+halo)   VMEM scratch: 128-aligned input window
#   slab_ref  : (K, TM)          VMEM scratch: fused-K staging slab
# ----------------------------------------------------------------------------
def _make_kernel(tap_offsets, cin, tm, win_len):
    n_taps = len(tap_offsets)

    def kernel(x_ref, w_ref, shift_ref, o_ref, win_ref, slab_ref):
        # One lane-aligned window load per tile (base is a multiple of tm >= 128).
        base = pl.multiple_of(pl.program_id(1) * tm, 128)
        win_ref[...] = x_ref[0, :, pl.ds(base, win_len)]
        # Stack the KH*KW shifted views into the fused-K slab; each view is a
        # static-offset slice of the aligned window (shift work amortized once).
        for t in range(n_taps):
            off = tap_offsets[t]
            slab_ref[t * cin:(t + 1) * cin, :] = win_ref[:, off:off + tm]
        # Single MXU contraction over K = KH*KW*Cin with f32 accumulation.
        acc = jnp.dot(w_ref[...], slab_ref[...], preferred_element_type=jnp.float32)
        # BN shift (scale already folded into the weights) + ReLU; cast at the store.
        y = acc + shift_ref[...]
        o_ref[0] = jnp.maximum(y, 0.0).astype(o_ref.dtype)

    return kernel


def conv_block_forward(x_nchw, weight_oihw, gamma, beta, running_mean, running_var,
                       *, stride=1, padding=1, eps=1e-5, compute_dtype=jnp.bfloat16):
    """ConvBlock forward.  x: NCHW float32.  Returns NCHW in compute_dtype (bf16)."""
    n, cin, h, w = x_nchw.shape
    cout, cin_w, kh, kw = weight_oihw.shape
    assert cin == cin_w

    hp, wp = h + 2 * padding, w + 2 * padding
    ho_d, wo_d = hp - kh + 1, wp - kw + 1          # dense (stride-1) output size
    assert ho_d >= 1 and wo_d >= 1

    m_full = ho_d * wp                             # valid region of full-width output
    m_out = _round_up(m_full, 128)                 # lane-dense kernel output width
    max_off = (kh - 1) * wp + (kw - 1)             # largest tap offset
    halo = _round_up(max_off, 128)                 # per-tile window halo (lane aligned)
    l_pad = m_out + halo                           # padded flattened-image length
    cout_p = _round_up(cout, 16)                   # bf16 vreg packs [16,128]
    k = kh * kw * cin                              # fused contraction depth

    # ---- glue: pad + flatten input (single copy, no KH*KW blow-up) ----------------
    xp = jnp.pad(x_nchw, ((0, 0), (0, 0), (padding, padding), (padding, padding)))
    x_flat = xp.reshape(n, cin, hp * wp)
    x_flat = jnp.pad(x_flat, ((0, 0), (0, 0), (0, l_pad - hp * wp))).astype(compute_dtype)

    # ---- glue: fold BN scale into weights; flatten to (CoutP, K) in [tap, c] order --
    scale = gamma / jnp.sqrt(running_var + eps)
    shift = beta - running_mean * scale
    w_eff = weight_oihw * scale.reshape(cout, 1, 1, 1)                 # f32 fold
    w_flat = jnp.transpose(w_eff, (0, 2, 3, 1)).reshape(cout, k)       # [o, (i*kw+j)*cin+c]
    w_flat = jnp.pad(w_flat, ((0, cout_p - cout), (0, 0))).astype(compute_dtype)
    shift_p = jnp.pad(shift, (0, cout_p - cout)).reshape(cout_p, 1).astype(jnp.float32)

    # ---- tiling ---------------------------------------------------------------------
    tm = _pick_tile(m_out, cout_p, k, cin, prefer_multiple_tiles=(n == 1))
    n_mt = m_out // tm
    win_len = tm + halo
    tap_offsets = tuple(i * wp + j for i in range(kh) for j in range(kw))
    kernel = _make_kernel(tap_offsets, cin, tm, win_len)

    # ---- VMEM budget (clamped against actual chip capacity; v7x has only 64 MiB) -----
    itemsize = jnp.dtype(compute_dtype).itemsize
    est = (2 * cin * l_pad * itemsize            # double-buffered input block
           + 2 * cout_p * k * itemsize           # weight block
           + 2 * cout_p * 4                      # shift block
           + 2 * cout_p * tm * itemsize          # double-buffered bf16 output block
           + cin * win_len * itemsize            # window scratch
           + k * tm * itemsize                   # fused-K slab scratch
           + 2 * cout_p * tm * 4)                # matmul result / epilogue temporaries
    try:
        vmem_cap = int(pltpu.get_tpu_info().vmem_capacity_bytes)
    except Exception:                            # conservative fallback (v7x size)
        vmem_cap = 64 * 2 ** 20
    vmem_limit = int(min(int(0.85 * vmem_cap), max(16 * 2 ** 20, 2 * est)))

    cost = pl.CostEstimate(
        flops=int(2 * n * m_out * k * cout_p),
        transcendentals=0,
        bytes_accessed=int(n * cin * l_pad * itemsize
                           + n * cout_p * m_out * itemsize
                           + cout_p * k * itemsize),
    )

    # ---- Pallas call: fused-K shifted-window conv + BN-shift + ReLU ------------------
    out_full = pl.pallas_call(
        kernel,
        out_shape=jax.ShapeDtypeStruct((n, cout_p, m_out), compute_dtype),
        grid_spec=pltpu.PrefetchScalarGridSpec(
            num_scalar_prefetch=0,
            grid=(n, n_mt),
            in_specs=[
                # whole flattened image of one batch element (resident across mt axis)
                pl.BlockSpec((1, cin, l_pad), lambda b, mt: (b, 0, 0)),
                pl.BlockSpec((cout_p, k), lambda b, mt: (0, 0)),
                pl.BlockSpec((cout_p, 1), lambda b, mt: (0, 0)),
            ],
            out_specs=pl.BlockSpec((1, cout_p, tm), lambda b, mt: (b, 0, mt)),
            scratch_shapes=[
                pltpu.VMEM((cin, win_len), compute_dtype),   # aligned input window
                pltpu.VMEM((k, tm), compute_dtype),          # fused-K staging slab
            ],
        ),
        compiler_params=pltpu.CompilerParams(
            dimension_semantics=("parallel", "parallel"),
            vmem_limit_bytes=vmem_limit,
        ),
        cost_estimate=cost,
    )(x_flat, w_flat, shift_p)

    # ---- glue: strip padding columns, reshape straight to NCHW (no transpose) --------
    dense = out_full[:, :cout, :m_full].reshape(n, cout, ho_d, wp)[:, :, :, :wo_d]
    if stride > 1:
        dense = dense[:, :, ::stride, ::stride]
    return dense  # bf16 by design (halves HBM writeback)


def _reference(x, weight, gamma, beta, running_mean, running_var,
               *, stride=1, padding=1, eps=1e-5, quantize_like_kernel=False):
    """Plain-JAX reference of the same forward pass (optionally mirroring the kernel's
    bf16-operand precision so only summation order / output rounding differ)."""
    scale = gamma / jnp.sqrt(running_var + eps)
    shift = beta - running_mean * scale
    w_eff = weight * scale.reshape(-1, 1, 1, 1)
    if quantize_like_kernel:
        x = x.astype(jnp.bfloat16).astype(jnp.float32)
        w_eff = w_eff.astype(jnp.bfloat16).astype(jnp.float32)
    y = jax.lax.conv_general_dilated(
        x, w_eff,
        window_strides=(stride, stride),
        padding=[(padding, padding), (padding, padding)],
        dimension_numbers=("NCHW", "OIHW", "NCHW"),
    )
    return jnp.maximum(y + shift.reshape(1, -1, 1, 1), 0.0)


if __name__ == "__main__":
    # ConvBlock(in_planes=4, out_planes=8, kernel_size=3, stride=1, padding=1)
    N, CIN, H, W = 2, 4, 16, 16
    COUT, KH, KW = 8, 3, 3
    STRIDE, PAD = 1, 1

    key = jax.random.PRNGKey(0)
    kx, kw_, kg, kb, km, kv = jax.random.split(key, 6)

    x = jax.random.normal(kx, (N, CIN, H, W), dtype=jnp.float32)
    weight = jax.random.normal(kw_, (COUT, CIN, KH, KW), dtype=jnp.float32) * 0.1
    gamma = jax.random.normal(kg, (COUT,), dtype=jnp.float32) * 0.1 + 1.0
    beta = jax.random.normal(kb, (COUT,), dtype=jnp.float32) * 0.1
    running_mean = jax.random.normal(km, (COUT,), dtype=jnp.float32) * 0.1
    running_var = jnp.abs(jax.random.normal(kv, (COUT,), dtype=jnp.float32)) * 0.5 + 0.5

    fwd = jax.jit(functools.partial(conv_block_forward, stride=STRIDE, padding=PAD))
    out = jax.block_until_ready(fwd(x, weight, gamma, beta, running_mean, running_var))
    assert out.shape == (N, COUT, H, W), out.shape
    assert out.dtype == jnp.bfloat16, out.dtype

    # Compare against the reference evaluated with the kernel's operand precision
    # (bf16 image / bf16 scale-folded weights); remaining differences are f32
    # summation order (~1e-6) and the bf16 output rounding (<~0.5% relative).
    ref = _reference(x, weight, gamma, beta, running_mean, running_var,
                     stride=STRIDE, padding=PAD, quantize_like_kernel=True)
    out_f32 = out.astype(jnp.float32)
    max_err = float(jnp.max(jnp.abs(out_f32 - ref)))
    assert jnp.allclose(out_f32, ref, rtol=2e-2, atol=2e-2), max_err

    print("KERNEL_OK")
</pallas_src>

<mosaic_0001>
module attributes {stable_mosaic.version = 11 : i64} {
  func.func @kernel(%arg0: i32, %arg1: i32, %arg2: memref<1x4x512xbf16, #tpu.memory_space<vmem>>, %arg3: memref<16x36xbf16, #tpu.memory_space<vmem>>, %arg4: memref<16x1xf32, #tpu.memory_space<vmem>>, %arg5: memref<1x16x384xbf16, #tpu.memory_space<vmem>>, %arg6: memref<4x512xbf16, #tpu.memory_space<vmem>>, %arg7: memref<36x384xbf16, #tpu.memory_space<vmem>>) attributes {dimension_semantics = [#tpu.dimension_semantics<parallel>, #tpu.dimension_semantics<parallel>], iteration_bounds = array<i64: 2, 1>, scalar_prefetch = 0 : i64, scratch_operands = 2 : i64, tpu.core_type = #tpu.core_type<tc>, window_params = [{transform_indices = @transform_0, window_bounds = array<i64: 1, 4, 512>}, {pipeline_mode = #tpu.pipeline_mode<synchronous>, transform_indices = @transform_1, window_bounds = array<i64: 16, 36>}, {pipeline_mode = #tpu.pipeline_mode<synchronous>, transform_indices = @transform_2, window_bounds = array<i64: 16, 1>}, {transform_indices = @transform_3, window_bounds = array<i64: 1, 16, 384>}]} {
    %c384_i32 = arith.constant 384 : i32
    %0 = arith.muli %arg1, %c384_i32 : i32
    %1 = tpu.assume_multiple %0, 128 : i32
    %c0 = arith.constant 0 : index
    %c0_0 = arith.constant 0 : index
    %2 = arith.index_cast %1 : i32 to index
    %3 = vector.load %arg2[%c0, %c0_0, %2] : memref<1x4x512xbf16, #tpu.memory_space<vmem>>, vector<1x4x512xbf16>
    %4 = vector.shape_cast %3 : vector<1x4x512xbf16> to vector<4x512xbf16>
    %c0_1 = arith.constant 0 : index
    %c0_2 = arith.constant 0 : index
    %5 = vector.load %arg6[%c0_1, %c0_2] : memref<4x512xbf16, #tpu.memory_space<vmem>>, vector<4x512xbf16>
    tpu.vector_store %arg6[%c0_1, %c0_2], %4 {strides = array<i32>} : memref<4x512xbf16, #tpu.memory_space<vmem>>, vector<4x512xbf16>,
    %c0_3 = arith.constant 0 : index
    %c0_4 = arith.constant 0 : index
    %6 = vector.load %arg6[%c0_3, %c0_4] : memref<4x512xbf16, #tpu.memory_space<vmem>>, vector<4x384xbf16>
    %c0_5 = arith.constant 0 : index
    %c0_6 = arith.constant 0 : index
    %7 = vector.load %arg7[%c0_5, %c0_6] : memref<36x384xbf16, #tpu.memory_space<vmem>>, vector<4x384xbf16>
    tpu.vector_store %arg7[%c0_5, %c0_6], %6 {strides = array<i32>} : memref<36x384xbf16, #tpu.memory_space<vmem>>, vector<4x384xbf16>,
    %c0_7 = arith.constant 0 : index
    %c1 = arith.constant 1 : index
    %8 = vector.load %arg6[%c0_7, %c1] : memref<4x512xbf16, #tpu.memory_space<vmem>>, vector<4x384xbf16>
    %c4 = arith.constant 4 : index
    %c0_8 = arith.constant 0 : index
    %9 = vector.load %arg7[%c4, %c0_8] : memref<36x384xbf16, #tpu.memory_space<vmem>>, vector<4x384xbf16>
    tpu.vector_store %arg7[%c4, %c0_8], %8 {strides = array<i32>} : memref<36x384xbf16, #tpu.memory_space<vmem>>, vector<4x384xbf16>,
    %c0_9 = arith.constant 0 : index
    %c2 = arith.constant 2 : index
    %10 = vector.load %arg6[%c0_9, %c2] : memref<4x512xbf16, #tpu.memory_space<vmem>>, vector<4x384xbf16>
    %c8 = arith.constant 8 : index
    %c0_10 = arith.constant 0 : index
    %11 = vector.load %arg7[%c8, %c0_10] : memref<36x384xbf16, #tpu.memory_space<vmem>>, vector<4x384xbf16>
    tpu.vector_store %arg7[%c8, %c0_10], %10 {strides = array<i32>} : memref<36x384xbf16, #tpu.memory_space<vmem>>, vector<4x384xbf16>,
    %c0_11 = arith.constant 0 : index
    %c18 = arith.constant 18 : index
    %12 = vector.load %arg6[%c0_11, %c18] : memref<4x512xbf16, #tpu.memory_space<vmem>>, vector<4x384xbf16>
    %c12 = arith.constant 12 : index
    %c0_12 = arith.constant 0 : index
    %13 = vector.load %arg7[%c12, %c0_12] : memref<36x384xbf16, #tpu.memory_space<vmem>>, vector<4x384xbf16>
    tpu.vector_store %arg7[%c12, %c0_12], %12 {strides = array<i32>} : memref<36x384xbf16, #tpu.memory_space<vmem>>, vector<4x384xbf16>,
    %c0_13 = arith.constant 0 : index
    %c19 = arith.constant 19 : index
    %14 = vector.load %arg6[%c0_13, %c19] : memref<4x512xbf16, #tpu.memory_space<vmem>>, vector<4x384xbf16>
    %c16 = arith.constant 16 : index
    %c0_14 = arith.constant 0 : index
    %15 = vector.load %arg7[%c16, %c0_14] : memref<36x384xbf16, #tpu.memory_space<vmem>>, vector<4x384xbf16>
    tpu.vector_store %arg7[%c16, %c0_14], %14 {strides = array<i32>} : memref<36x384xbf16, #tpu.memory_space<vmem>>, vector<4x384xbf16>,
    %c0_15 = arith.constant 0 : index
    %c20 = arith.constant 20 : index
    %16 = vector.load %arg6[%c0_15, %c20] : memref<4x512xbf16, #tpu.memory_space<vmem>>, vector<4x384xbf16>
    %c20_16 = arith.constant 20 : index
    %c0_17 = arith.constant 0 : index
    %17 = vector.load %arg7[%c20_16, %c0_17] : memref<36x384xbf16, #tpu.memory_space<vmem>>, vector<4x384xbf16>
    tpu.vector_store %arg7[%c20_16, %c0_17], %16 {strides = array<i32>} : memref<36x384xbf16, #tpu.memory_space<vmem>>, vector<4x384xbf16>,
    %c0_18 = arith.constant 0 : index
    %c36 = arith.constant 36 : index
    %18 = vector.load %arg6[%c0_18, %c36] : memref<4x512xbf16, #tpu.memory_space<vmem>>, vector<4x384xbf16>
    %c24 = arith.constant 24 : index
    %c0_19 = arith.constant 0 : index
    %19 = vector.load %arg7[%c24, %c0_19] : memref<36x384xbf16, #tpu.memory_space<vmem>>, vector<4x384xbf16>
    tpu.vector_store %arg7[%c24, %c0_19], %18 {strides = array<i32>} : memref<36x384xbf16, #tpu.memory_space<vmem>>, vector<4x384xbf16>,
    %c0_20 = arith.constant 0 : index
    %c37 = arith.constant 37 : index
    %20 = vector.load %arg6[%c0_20, %c37] : memref<4x512xbf16, #tpu.memory_space<vmem>>, vector<4x384xbf16>
    %c28 = arith.constant 28 : index
    %c0_21 = arith.constant 0 : index
    %21 = vector.load %arg7[%c28, %c0_21] : memref<36x384xbf16, #tpu.memory_space<vmem>>, vector<4x384xbf16>
    tpu.vector_store %arg7[%c28, %c0_21], %20 {strides = array<i32>} : memref<36x384xbf16, #tpu.memory_space<vmem>>, vector<4x384xbf16>,
    %c0_22 = arith.constant 0 : index
    %c38 = arith.constant 38 : index
    %22 = vector.load %arg6[%c0_22, %c38] : memref<4x512xbf16, #tpu.memory_space<vmem>>, vector<4x384xbf16>
    %c32 = arith.constant 32 : index
    %c0_23 = arith.constant 0 : index
    %23 = vector.load %arg7[%c32, %c0_23] : memref<36x384xbf16, #tpu.memory_space<vmem>>, vector<4x384xbf16>
    tpu.vector_store %arg7[%c32, %c0_23], %22 {strides = array<i32>} : memref<36x384xbf16, #tpu.memory_space<vmem>>, vector<4x384xbf16>,
    %c0_24 = arith.constant 0 : index
    %c0_25 = arith.constant 0 : index
    %24 = vector.load %arg3[%c0_24, %c0_25] : memref<16x36xbf16, #tpu.memory_space<vmem>>, vector<16x36xbf16>
    %c0_26 = arith.constant 0 : index
    %c0_27 = arith.constant 0 : index
    %25 = vector.load %arg7[%c0_26, %c0_27] : memref<36x384xbf16, #tpu.memory_space<vmem>>, vector<36x384xbf16>
    %cst = arith.constant dense<0.000000e+00> : vector<16x384xf32>
    %26 = tpu.matmul %24, %25, %cst {dimension_numbers = #tpu.dot_dimension_numbers<[1], [0], [0], [1], [0, 0, 1, 1], [], []>} : vector<16x36xbf16>, vector<36x384xbf16>, vector<16x384xf32> -> vector<16x384xf32>
    %c0_28 = arith.constant 0 : index
    %c0_29 = arith.constant 0 : index
    %27 = vector.load %arg4[%c0_28, %c0_29] : memref<16x1xf32, #tpu.memory_space<vmem>>, vector<16x1xf32>
    %28 = vector.broadcast %27 : vector<16x1xf32> to vector<16x384xf32>
    %29 = arith.addf %26, %28 : vector<16x384xf32>
    %cst_30 = arith.constant 0.000000e+00 : f32
    %30 = vector.broadcast %cst_30 : f32 to vector<16x384xf32>
    %31 = arith.maximumf %29, %30 : vector<16x384xf32>
    %32 = arith.truncf %31 : vector<16x384xf32> to vector<16x384xbf16>
    %c0_31 = arith.constant 0 : index
    %c0_32 = arith.constant 0 : index
    %c0_33 = arith.constant 0 : index
    %33 = vector.load %arg5[%c0_31, %c0_32, %c0_33] : memref<1x16x384xbf16, #tpu.memory_space<vmem>>, vector<1x16x384xbf16>
    %34 = vector.shape_cast %33 : vector<1x16x384xbf16> to vector<16x384xbf16>
    %35 = vector.shape_cast %32 : vector<16x384xbf16> to vector<1x16x384xbf16>
    tpu.vector_store %arg5[%c0_31, %c0_32, %c0_33], %35 {strides = array<i32>} : memref<1x16x384xbf16, #tpu.memory_space<vmem>>, vector<1x16x384xbf16>,
    return
  }
  func.func @transform_0(%arg0: i32, %arg1: i32) -> (i32, i32, i32) {
    %c0_i32 = arith.constant 0 : i32
    %c0_i32_0 = arith.constant 0 : i32
    %c0_i32_1 = arith.constant 0 : i32
    return %arg0, %c0_i32, %c0_i32_0 : i32, i32, i32
  }
  func.func @transform_1(%arg0: i32, %arg1: i32) -> (i32, i32) {
    %c0_i32 = arith.constant 0 : i32
    %c0_i32_0 = arith.constant 0 : i32
    %c0_i32_1 = arith.constant 0 : i32
    return %c0_i32, %c0_i32_0 : i32, i32
  }
  func.func @transform_2(%arg0: i32, %arg1: i32) -> (i32, i32) {
    %c0_i32 = arith.constant 0 : i32
    %c0_i32_0 = arith.constant 0 : i32
    %c0_i32_1 = arith.constant 0 : i32
    return %c0_i32, %c0_i32_0 : i32, i32
  }
  func.func @transform_3(%arg0: i32, %arg1: i32) -> (i32, i32, i32) {
    %c0_i32 = arith.constant 0 : i32
    %c0_i32_0 = arith.constant 0 : i32
    return %arg0, %c0_i32, %arg1 : i32, i32, i32
  }
}

</mosaic_0001>

<llo_original>
// kernel: conv_block_forward.1
$region0: #{conv_block_forward.1}
  #allocation0 [shape = 'u32[]', space=smem, size = 0x4, offset = 0x4, fixed_abs, tag = 'smem constant byte address 0x4 - core index']
  #allocation1 [shape = 'u32[144,128]{1,0:T(1,128)}', space=vmem, size = 0x12000, scoped, tag = 'internal scratch']
  #allocation2 [shape = 'bf16[4,512]{1,0:T(4,128)(2,1)}', space=vmem, size = 0x1000, scoped, tag = 'scratch operand']
  #allocation3 [shape = 'bf16[36,384]{1,0:T(8,128)(2,1)}', space=vmem, size = 0x7800, scoped, tag = 'scratch operand']
  %s0 = inlined_call_operand.vmem [shape: bf16[2,4,512], index: 0, kind: input, shape index: {}]
  %s1 = inlined_call_operand.vmem [shape: bf16[16,36], index: 1, kind: input, shape index: {}]
  %s2 = inlined_call_operand.vmem [shape: f32[16,1], index: 2, kind: input, shape index: {}]
  %s3 = inlined_call_operand.vmem [shape: bf16[2,16,384], index: 3, kind: output, shape index: {}]
  %s4 = sld [smem:[#allocation0]]
  $region45: #{conv_block_forward.1} parent=0
    _
  %s6 = ssub.s32 1, %s4
  %s7 = scalar_select 0, %s6, %s4
  loop: start=0, step=1, limit=4
  $region2: #{conv_block_forward.1} parent=0 // loop_pre_header
    _
  $region3: #{conv_block_forward.1} parent=0 // loop_header
    %s9 = sphi 0, %s13
    %p10 = scmp.ge.s32.totalorder %s9, 4
    %s16 = sphi 0, %s28
    %s17 = sphi 0, %s24
    %s18 = sphi 0, %s16
    %s19 = sphi 0, %s17
    %s20 = sphi 0, %s18
    %s21 = sphi 0, %s19
    %s31 = sphi 0, %s33
    %s34 = sphi 0, %s31
    %s35 = sphi 0, %s34
    %s51 = sphi 0, %s35
    %s55 = sphi 0, %s55
    %s57 = sphi 0, %s55
    %s58 = sphi 0, %s57
    %s72 = sphi 0, %s58
    %s76 = sphi 0, %s76
    %s78 = sphi 0, %s76
    %s79 = sphi 0, %s78
    %s93 = sphi 0, %s79
    %s101 = sphi 0, %s103
    %s104 = sphi 0, %s101
    %s105 = sphi 0, %s104
    %s121 = sphi 0, %s105
  $region4: #{conv_block_forward.1} parent=0 // loop_header_branch
    %12 = sbr.rel (%p10) target = $region8
  $region5: #{conv_block_forward.1} parent=0 // loop_body
    %s14 = ssub.s32 %s9, 1
    %s15 = ssub.s32 %s9, 2
    %s22 = sadd.s32 1, %s17
    %p23 = scmp.ge.s32.totalorder %s22, 1
    %s24 = scalar_select %p23, 0, %s22
    %s25 = sadd.s32 1, %s16
    %s26 = scalar_select %p23, %s25, %s16
    %p27 = scmp.ge.s32.totalorder %s26, 2
    %s28 = scalar_select %p27, 0, %s26
    %s29 = ssub.s32 %s16, %s28
    %p30 = scmp.eq.s32.totalorder %s29, 0
    %s32 = sadd.s32 %s31, 1
    %s33 = scalar_select %p30, %s31, %s32
    %p36 = pneg %p30
    %p37 = scmp.eq.s32.totalorder %s9, 1
    %p38 = por %p36, %p37
    %p39 = scmp.ne.s32.totalorder %s31, %s34
    %p40 = scmp.eq.s32.totalorder %s9, 0
    %p41 = por %p39, %p40
    %p42 = scmp.ne.s32.totalorder %s31, %s34
    %p43 = scmp.eq.s32.totalorder %s14, 1
    %p44 = por %p42, %p43
    %p45 = scmp.ne.s32.totalorder %s34, %s35
    %p46 = scmp.eq.s32.totalorder %s14, 0
    %p47 = por %p45, %p46
    %p48 = scmp.ne.s32.totalorder %s34, %s35
    %p49 = scmp.eq.s32.totalorder %s15, 1
    %p50 = por %p48, %p49
    %p52 = scmp.ne.s32.totalorder %s35, %s51
    %p53 = scmp.eq.s32.totalorder %s15, 0
    %p54 = por %p52, %p53
    %s56 = sadd.s32 %s55, 1
    %p59 = scmp.eq.s32.totalorder %s9, 1
    %p60 = scmp.ne.s32.totalorder %s55, %s57
    %p61 = scmp.eq.s32.totalorder %s9, 0
    %p62 = por %p60, %p61
    %p63 = scmp.ne.s32.totalorder %s55, %s57
    %p64 = scmp.eq.s32.totalorder %s14, 1
    %p65 = por %p63, %p64
    %p66 = scmp.ne.s32.totalorder %s57, %s58
    %p67 = scmp.eq.s32.totalorder %s14, 0
    %p68 = por %p66, %p67
    %p69 = scmp.ne.s32.totalorder %s57, %s58
    %p70 = scmp.eq.s32.totalorder %s15, 1
    %p71 = por %p69, %p70
    %p73 = scmp.ne.s32.totalorder %s58, %s72
    %p74 = scmp.eq.s32.totalorder %s15, 0
    %p75 = por %p73, %p74
    %s77 = sadd.s32 %s76, 1
    %p80 = scmp.eq.s32.totalorder %s9, 1
    %p81 = scmp.ne.s32.totalorder %s76, %s78
    %p82 = scmp.eq.s32.totalorder %s9, 0
    %p83 = por %p81, %p82
    %p84 = scmp.ne.s32.totalorder %s76, %s78
    %p85 = scmp.eq.s32.totalorder %s14, 1
    %p86 = por %p84, %p85
    %p87 = scmp.ne.s32.totalorder %s78, %s79
    %p88 = scmp.eq.s32.totalorder %s14, 0
    %p89 = por %p87, %p88
    %p90 = scmp.ne.s32.totalorder %s78, %s79
    %p91 = scmp.eq.s32.totalorder %s15, 1
    %p92 = por %p90, %p91
    %p94 = scmp.ne.s32.totalorder %s79, %s93
    %p95 = scmp.eq.s32.totalorder %s15, 0
    %p96 = por %p94, %p95
    %s97 = ssub.s32 %s16, %s28
    %s98 = ssub.s32 %s17, %s24
    %s99 = sor.u32 %s97, %s98
    %p100 = scmp.eq.s32.totalorder %s99, 0
    %s102 = sadd.s32 %s101, 1
    %s103 = scalar_select %p100, %s101, %s102
    %p106 = pneg %p100
    %p107 = scmp.eq.s32.totalorder %s9, 1
    %p108 = por %p106, %p107
    %p109 = scmp.ne.s32.totalorder %s101, %s104
    %p110 = scmp.eq.s32.totalorder %s9, 0
    %p111 = por %p109, %p110
    %p112 = scmp.ne.s32.totalorder %s101, %s104
    %p113 = scmp.eq.s32.totalorder %s14, 1
    %p114 = por %p112, %p113
    %p115 = scmp.ne.s32.totalorder %s104, %s105
    %p116 = scmp.eq.s32.totalorder %s14, 0
    %p117 = por %p115, %p116
    %p118 = scmp.ne.s32.totalorder %s104, %s105
    %p119 = scmp.eq.s32.totalorder %s15, 1
    %p120 = por %p118, %p119
    %p122 = scmp.ne.s32.totalorder %s105, %s121
    %p123 = scmp.eq.s32.totalorder %s15, 0
    %p124 = por %p122, %p123
    %p125 = scmp.le.s32.totalorder 1, %s9
    %p126 = scmp.lt.s32.totalorder %s9, 3
    %p127 = pnand %p125, %p126
    %p128 = pneg %p127
    // Predicated region
    $region9: #{conv_block_forward.1} parent=5 // pred_check
      _
    $region10: #{conv_block_forward.1} parent=5 // pred_check_branch
      %130 = sbr.rel (%p127) target = $region12
    $region11: #{conv_block_forward.1} parent=5 // pred_region
      %s131 = ssub.s32 %s9, 1
      // Predicated region
      $region13: #{conv_block_forward.1} parent=11 // pred_check
        %p132 = pneg %p68
      $region14: #{conv_block_forward.1} parent=11 // pred_check_branch
        %134 = sbr.rel (%p132) target = $region16
      $region15: #{conv_block_forward.1} parent=11 // pred_region
        _
      $region16: #{conv_block_forward.1} parent=11 // pred_fallthru
        _
      // Predicated region
      $region17: #{conv_block_forward.1} parent=11 // pred_check
        %p135 = pneg %p89
      $region18: #{conv_block_forward.1} parent=11 // pred_check_branch
        %137 = sbr.rel (%p135) target = $region20
      $region19: #{conv_block_forward.1} parent=11 // pred_region
        _
      $region20: #{conv_block_forward.1} parent=11 // pred_fallthru
        _
    $region12: #{conv_block_forward.1} parent=5 // pred_fallthru
      _
    %p138 = scmp.lt.s32.totalorder %s9, 2
    // Predicated region
    $region21: #{conv_block_forward.1} parent=5 // pred_check
      %p139 = pneg %p138
    $region22: #{conv_block_forward.1} parent=5 // pred_check_branch
      %141 = sbr.rel (%p139) target = $region24
    $region23: #{conv_block_forward.1} parent=5 // pred_region
      // Predicated region
      $region25: #{conv_block_forward.1} parent=23 // pred_check
        %p142 = pneg %p41
      $region26: #{conv_block_forward.1} parent=23 // pred_check_branch
        %144 = sbr.rel (%p142) target = $region28
      $region27: #{conv_block_forward.1} parent=23 // pred_region
        %p145 = scmp.lt.s32.totalorder %s16, 1
        %s146 = scalar_select %p145, %s16, 1
        %s147 = smul.addr %s146, 4
        %s148 = smul.addr %s147, 2
        %s149 = scalar_lea.vmem %s0, %s148
      $region28: #{conv_block_forward.1} parent=23 // pred_fallthru
        _
    $region24: #{conv_block_forward.1} parent=5 // pred_fallthru
      _
    %p150 = scmp.le.s32.totalorder 1, %s9
    %p151 = scmp.lt.s32.totalorder %s9, 3
    %p152 = pnand %p150, %p151
    %p153 = pneg %p152
    // Predicated region
    $region29: #{conv_block_forward.1} parent=5 // pred_check
      _
    $region30: #{conv_block_forward.1} parent=5 // pred_check_branch
      %155 = sbr.rel (%p152) target = $region32
    $region31: #{conv_block_forward.1} parent=5 // pred_region
      %s156 = ssub.s32 %s9, 1
      %p157 = scmp.lt.s32.totalorder %s18, 1
      %s158 = scalar_select %p157, %s18, 1
      %s159 = smul.addr %s158, 4
      %s160 = smul.addr %s159, 2
      %s161 = scalar_lea.vmem %s0, %s160
      %p162 = pneg %p47
      %p163 = pneg %p44
      %p164 = pneg %p68
      %p165 = pneg %p65
      %p166 = pneg %p89
      %p167 = pneg %p86
      %p168 = pneg %p117
      %p169 = pneg %p114
      %s170 = smul.u32 3, %s19
      %p171 = scmp.lt.s32.totalorder %s18, 1
      %s172 = scalar_select %p171, %s18, 1
      %p173 = scmp.lt.s32.totalorder %s170, 2
      %s174 = scalar_select %p173, %s170, 2
      %s175 = smul.addr %s172, 6
      %s176 = sadd.s32 %s174, %s175
      %s177 = smul.addr %s176, 4
      %s178 = scalar_lea.vmem %s3, %s177
      %p179 = scmp.lt.s32.totalorder %s18, 1
      %s180 = scalar_select %p179, %s18, 1
      %s181 = smul.addr %s180, 4
      %s182 = smul.addr %s181, 2
      %s183 = scalar_lea.vmem %s0, %s182
      %s184 = smul.u32 3, %s19
      %p185 = scmp.lt.s32.totalorder %s18, 1
      %s186 = scalar_select %p185, %s18, 1
      %p187 = scmp.lt.s32.totalorder %s184, 2
      %s188 = scalar_select %p187, %s184, 2
      %s189 = smul.addr %s186, 6
      %s190 = sadd.s32 %s188, %s189
      %s191 = smul.addr %s190, 4
      %s192 = scalar_lea.vmem %s3, %s191
      %s193 = smul.u32 3, %s19
      %s195 = smul.u32 %s19, 384
      %s196 = sshra.s32 %s195, 7
      %s197 = sand.u32 %s195, 127
      %s198 = smul.addr %s196, 2
      %s199 = scalar_lea.vmem %s183, %s198
      %v200 = vld [vmem:[%s199] sm:$0xff]
      %201 = vst [vmem:[#allocation2] sm:$0xff] %v200
      %v202 = vld [vmem:[#allocation2] sm:$0x3f]
      %v204 = vcombine.high %v202, %v202
      %v206 = vunpack.c.l.s4 1983009808
      %v207 = vunpack.c.0.s8 %v206
      %v208 = vlaneseq
      %v209 = vshrl.u32 %v208, 7
      %v210 = vsub.s32 %v207, %v209
      %v211 = vrot.slane %v202, %v210
      %v213 = vunpack.c.l.s4 1983009808
      %v214 = vunpack.c.0.s8 %v213
      %v215 = vlaneseq
      %v216 = vshrl.u32 %v215, 7
      %v217 = vsub.s32 %v214, %v216
      %v218 = vrot.slane %v204, %v217
      %221 = vst [vmem:[#allocation3] sm:$0x33] %v211
      %222 = vst [vmem:[#allocation3 + $0x8] sm:$0x3] %v218
      %v223 = vld [vmem:[#allocation2] sm:$0xff]
      %v225 = vcombine.low %v223, %v223
      %v227 = vunpack.c.l.s4 1983009808
      %v228 = vunpack.c.0.s8 %v227
      %v229 = vlaneseq
      %v230 = vshrl.u32 %v229, 7
      %v231 = vsub.s32 %v228, %v230
      %v232 = vrot.slane %v225, %v231
      %v234 = vunpack.c.l.s4 1983009808
      %v235 = vunpack.c.0.s8 %v234
      %v236 = vlaneseq
      %v237 = vshrl.u32 %v236, 7
      %v238 = vsub.s32 %v235, %v237
      %v239 = vrot.slane %v223, %v238
      %240 = vrot.lane.b32.xlu0 %v232, 127
      %v241 = vpop.permute.xlu0 %240
      %242 = vrot.lane.b32.xlu0 %v239, 127
      %v243 = vpop.permute.xlu0 %242
      %v244 = vrot.slane %v241, 4
      %v245 = vrot.slane %v243, 4
      %vm246 = vcmask 1043456
      %v247 = vsel %vm246, %v244, %v245
      %vm248 = vcmask 1039360
      %v249 = vsel %vm248, %v241, %v247
      %v250 = vsel %vm248, %v243, %v245
      %253 = vst [vmem:[#allocation3] sm:$0xcc] %v249
      %254 = vst [vmem:[#allocation3 + $0x8] sm:$0xc] %v250
      %v255 = vld [vmem:[#allocation2] sm:$0xff]
      %v257 = vcombine.high %v255, %v255
      %v259 = vunpack.c.l.s4 1983009808
      %v260 = vunpack.c.0.s8 %v259
      %v261 = vlaneseq
      %v262 = vshrl.u32 %v261, 7
      %v263 = vsub.s32 %v260, %v262
      %v264 = vrot.slane %v255, %v263
      %v266 = vunpack.c.l.s4 1983009808
      %v267 = vunpack.c.0.s8 %v266
      %v268 = vlaneseq
      %v269 = vshrl.u32 %v268, 7
      %v270 = vsub.s32 %v267, %v269
      %v271 = vrot.slane %v257, %v270
      %272 = vrot.lane.b32.xlu0 %v264, 126
      %v273 = vpop.permute.xlu0 %272
      %274 = vrot.lane.b32.xlu0 %v271, 126
      %v275 = vpop.permute.xlu0 %274
      %v276 = vrot.slane %v273, 4
      %v277 = vrot.slane %v275, 4
      %v278 = vsel %vm246, %v276, %v277
      %vm279 = vcmask 1031168
      %v280 = vsel %vm279, %v273, %v278
      %v281 = vsel %vm279, %v275, %v277
      %284 = vst [vmem:[#allocation3 + $0xc] sm:$0x33] %v280
      %285 = vst [vmem:[#allocation3 + $0x14] sm:$0x3] %v281
      %v286 = vld [vmem:[#allocation2] sm:$0xff]
      %v288 = vcombine.low %v286, %v286
      %v290 = vunpack.c.l.s4 1983009808
      %v291 = vunpack.c.0.s8 %v290
      %v292 = vlaneseq
      %v293 = vshrl.u32 %v292, 7
      %v294 = vsub.s32 %v291, %v293
      %v295 = vrot.slane %v288, %v294
      %v297 = vunpack.c.l.s4 1983009808
      %v298 = vunpack.c.0.s8 %v297
      %v299 = vlaneseq
      %v300 = vshrl.u32 %v299, 7
      %v301 = vsub.s32 %v298, %v300
      %v302 = vrot.slane %v286, %v301
      %303 = vrot.lane.b32.xlu0 %v295, 110
      %v304 = vpop.permute.xlu0 %303
      %305 = vrot.lane.b32.xlu0 %v302, 110
      %v306 = vpop.permute.xlu0 %305
      %v307 = vrot.slane %v304, 4
      %v308 = vrot.slane %v306, 4
      %v309 = vsel %vm246, %v307, %v308
      %vm310 = vcmask 900096
      %v311 = vsel %vm310, %v304, %v309
      %v312 = vsel %vm310, %v306, %v308
      %315 = vst [vmem:[#allocation3 + $0xc] sm:$0xcc] %v311
      %316 = vst [vmem:[#allocation3 + $0x14] sm:$0xc] %v312
      %v317 = vld [vmem:[#allocation2] sm:$0xff]
      %v319 = vcombine.high %v317, %v317
      %v321 = vunpack.c.l.s4 1983009808
      %v322 = vunpack.c.0.s8 %v321
      %v323 = vlaneseq
      %v324 = vshrl.u32 %v323, 7
      %v325 = vsub.s32 %v322, %v324
      %v326 = vrot.slane %v317, %v325
      %v328 = vunpack.c.l.s4 1983009808
      %v329 = vunpack.c.0.s8 %v328
      %v330 = vlaneseq
      %v331 = vshrl.u32 %v330, 7
      %v332 = vsub.s32 %v329, %v331
      %v333 = vrot.slane %v319, %v332
      %334 = vrot.lane.b32.xlu0 %v326, 109
      %v335 = vpop.permute.xlu0 %334
      %336 = vrot.lane.b32.xlu0 %v333, 109
      %v337 = vpop.permute.xlu0 %336
      %v338 = vrot.slane %v335, 4
      %v339 = vrot.slane %v337, 4
      %v340 = vsel %vm246, %v338, %v339
      %vm341 = vcmask 891904
      %v342 = vsel %vm341, %v335, %v340
      %v343 = vsel %vm341, %v337, %v339
      %346 = vst [vmem:[#allocation3 + $0x18] sm:$0x33] %v342
      %347 = vst [vmem:[#allocation3 + $0x20] sm:$0x3] %v343
      %v348 = vld [vmem:[#allocation2] sm:$0xff]
      %v350 = vcombine.low %v348, %v348
      %v352 = vunpack.c.l.s4 1983009808
      %v353 = vunpack.c.0.s8 %v352
      %v354 = vlaneseq
      %v355 = vshrl.u32 %v354, 7
      %v356 = vsub.s32 %v353, %v355
      %v357 = vrot.slane %v350, %v356
      %v359 = vunpack.c.l.s4 1983009808
      %v360 = vunpack.c.0.s8 %v359
      %v361 = vlaneseq
      %v362 = vshrl.u32 %v361, 7
      %v363 = vsub.s32 %v360, %v362
      %v364 = vrot.slane %v348, %v363
      %365 = vrot.lane.b32.xlu0 %v357, 108
      %v366 = vpop.permute.xlu0 %365
      %367 = vrot.lane.b32.xlu0 %v364, 108
      %v368 = vpop.permute.xlu0 %367
      %v369 = vrot.slane %v366, 4
      %v370 = vrot.slane %v368, 4
      %v371 = vsel %vm246, %v369, %v370
      %vm372 = vcmask 883712
      %v373 = vsel %vm372, %v366, %v371
      %v374 = vsel %vm372, %v368, %v370
      %377 = vst [vmem:[#allocation3 + $0x18] sm:$0xcc] %v373
      %378 = vst [vmem:[#allocation3 + $0x20] sm:$0xc] %v374
      %v379 = vld [vmem:[#allocation2] sm:$0xff]
      %v381 = vcombine.high %v379, %v379
      %v383 = vunpack.c.l.s4 1983009808
      %v384 = vunpack.c.0.s8 %v383
      %v385 = vlaneseq
      %v386 = vshrl.u32 %v385, 7
      %v387 = vsub.s32 %v384, %v386
      %v388 = vrot.slane %v379, %v387
      %v390 = vunpack.c.l.s4 1983009808
      %v391 = vunpack.c.0.s8 %v390
      %v392 = vlaneseq
      %v393 = vshrl.u32 %v392, 7
      %v394 = vsub.s32 %v391, %v393
      %v395 = vrot.slane %v381, %v394
      %396 = vrot.lane.b32.xlu0 %v388, 92
      %v397 = vpop.permute.xlu0 %396
      %398 = vrot.lane.b32.xlu0 %v395, 92
      %v399 = vpop.permute.xlu0 %398
      %v400 = vrot.slane %v397, 4
      %v401 = vrot.slane %v399, 4
      %v402 = vsel %vm246, %v400, %v401
      %vm403 = vcmask 752640
      %v404 = vsel %vm403, %v397, %v402
      %v405 = vsel %vm403, %v399, %v401
      %408 = vst [vmem:[#allocation3 + $0x24] sm:$0x33] %v404
      %409 = vst [vmem:[#allocation3 + $0x2c] sm:$0x3] %v405
      %v410 = vld [vmem:[#allocation2] sm:$0xff]
      %v412 = vcombine.low %v410, %v410
      %v414 = vunpack.c.l.s4 1983009808
      %v415 = vunpack.c.0.s8 %v414
      %v416 = vlaneseq
      %v417 = vshrl.u32 %v416, 7
      %v418 = vsub.s32 %v415, %v417
      %v419 = vrot.slane %v412, %v418
      %v421 = vunpack.c.l.s4 1983009808
      %v422 = vunpack.c.0.s8 %v421
      %v423 = vlaneseq
      %v424 = vshrl.u32 %v423, 7
      %v425 = vsub.s32 %v422, %v424
      %v426 = vrot.slane %v410, %v425
      %427 = vrot.lane.b32.xlu0 %v419, 91
      %v428 = vpop.permute.xlu0 %427
      %429 = vrot.lane.b32.xlu0 %v426, 91
      %v430 = vpop.permute.xlu0 %429
      %v431 = vrot.slane %v428, 4
      %v432 = vrot.slane %v430, 4
      %v433 = vsel %vm246, %v431, %v432
      %vm434 = vcmask 744448
      %v435 = vsel %vm434, %v428, %v433
      %v436 = vsel %vm434, %v430, %v432
      %439 = vst [vmem:[#allocation3 + $0x24] sm:$0xcc] %v435
      %440 = vst [vmem:[#allocation3 + $0x2c] sm:$0xc] %v436
      %v441 = vld [vmem:[#allocation2] sm:$0xff]
      %v443 = vcombine.high %v441, %v441
      %v445 = vunpack.c.l.s4 1983009808
      %v446 = vunpack.c.0.s8 %v445
      %v447 = vlaneseq
      %v448 = vshrl.u32 %v447, 7
      %v449 = vsub.s32 %v446, %v448
      %v450 = vrot.slane %v441, %v449
      %v452 = vunpack.c.l.s4 1983009808
      %v453 = vunpack.c.0.s8 %v452
      %v454 = vlaneseq
      %v455 = vshrl.u32 %v454, 7
      %v456 = vsub.s32 %v453, %v455
      %v457 = vrot.slane %v443, %v456
      %458 = vrot.lane.b32.xlu0 %v450, 90
      %v459 = vpop.permute.xlu0 %458
      %460 = vrot.lane.b32.xlu0 %v457, 90
      %v461 = vpop.permute.xlu0 %460
      %v462 = vrot.slane %v459, 4
      %v463 = vrot.slane %v461, 4
      %v464 = vsel %vm246, %v462, %v463
      %vm465 = vcmask 736256
      %v466 = vsel %vm465, %v459, %v464
      %v467 = vsel %vm465, %v461, %v463
      %470 = vst [vmem:[#allocation3 + $0x30] sm:$0x33] %v466
      %471 = vst [vmem:[#allocation3 + $0x38] sm:$0x3] %v467
      %v472 = vld [vmem:[%s1] sm:$0xf]
      %v473 = vld [vmem:[%s1 + $0x4] sm:$0xf]
      %v474 = vld [vmem:[#allocation3] sm:$0xff]
      %v475 = vld [vmem:[#allocation3 + $0x8] sm:$0xf]
      %v476 = vld [vmem:[#allocation3 + $0xc] sm:$0xff]
      %v477 = vld [vmem:[#allocation3 + $0x14] sm:$0xf]
      %v478 = vld [vmem:[#allocation3 + $0x18] sm:$0xff]
      %v479 = vld [vmem:[#allocation3 + $0x20] sm:$0xf]
      %v480 = vld [vmem:[#allocation3 + $0x24] sm:$0xff]
      %v481 = vld [vmem:[#allocation3 + $0x2c] sm:$0xf]
      %v482 = vld [vmem:[#allocation3 + $0x30] sm:$0x33]
      %v483 = vld [vmem:[#allocation3 + $0x38] sm:$0x3]
      %v484 = vld [vmem:[%s2] sm:$0xff]
      %v485 = vld [vmem:[%s2 + $0x8] sm:$0xff]
      %487 = vset.pattern.permute.xlu0 0
      %488 = vperm.xlu0 %487, %v484
      %v489 = vpop.permute.xlu0 %488
      %492 = vset.pattern.permute.xlu0 0
      %493 = vperm.xlu0 %492, %v485
      %v494 = vpop.permute.xlu0 %493
      %v498 = vunpack.c.l.b16 %v472
      %v499 = vunpack.c.l.b16 %v473
      %v500 = vpack.c.b16 %v499, %v498
      %v511 = vunpack.c.l.b16 %v474
      %v512 = vunpack.c.h.b16 %v474
      %v513 = vunpack.c.l.b16 %v475
      %v514 = vunpack.c.l.b16 %v476
      %v515 = vunpack.c.h.b16 %v476
      %v516 = vunpack.c.l.b16 %v477
      %v517 = vunpack.c.l.b16 %v478
      %v518 = vunpack.c.h.b16 %v478
      %v519 = vunpack.c.l.b16 %v479
      %v520 = vunpack.c.l.b16 %v480
      %v521 = vunpack.c.h.b16 %v480
      %v522 = vunpack.c.l.b16 %v481
      %v523 = vunpack.c.l.b16 %v482
      %v524 = vunpack.c.h.b16 %v482
      %v525 = vunpack.c.l.b16 %v483
      %v526 = vpack.c.b16 %v514, %v511
      %v527 = vpack.c.b16 %v515, %v512
      %v528 = vpack.c.b16 %v516, %v513
      %v529 = vpack.c.b16 %v520, %v517
      %v530 = vpack.c.b16 %v521, %v518
      %v531 = vpack.c.b16 %v522, %v519
      %v532 = vpack.c.b16 %v523, %v523
      %v533 = vpack.c.b16 %v524, %v524
      %v534 = vpack.c.b16 %v525, %v525
      %vm541 = vcmask 293888
      %v543 = vsel %vm541, %v500, 0
      %vm545 = vcmask 1041408
      %v547 = vsel %vm545, %v532, 0
      %v550 = vsel %vm545, %v533, 0
      %v553 = vsel %vm545, %v534, 0
      %555 = vmatprep.subr.bf16.mxu0 %v527
      %556 = vmatpush1.bf16.msra.mxu0 %v526
      %557 = vmatprep.subr.bf16.mxu0 %v530
      %558 = vmatpush1.bf16.msra.mxu0 %v529
      %559 = vmatprep.subr.bf16.mxu0 %v550
      %560 = vmatpush1.bf16.msra.mxu0 %v547
      %561 = vmatprep.subr.bf16.mxu0 0
      %562 = vmatpush1.bf16.msra.mxu0 0
      %563 = vmatprep.subr.bf16.mxu0 0
      %564 = vmatpush1.bf16.msra.mxu0 0
      %565 = vmatprep.subr.bf16.mxu0 0
      %566 = vmatpush1.bf16.msra.mxu0 0
      %567 = vmatprep.subr.bf16.mxu0 0
      %568 = vmatpush1.bf16.msra.mxu0 0
      %569 = vmatprep.subr.bf16.mxu0 0
      %570 = vmatpush1.bf16.msra.mxu0 0
      %571 = vmatprep.subr.bf16.mxu0 0
      %572 = vmatpush1.bf16.msra.mxu0 0
      %573 = vmatprep.subr.bf16.mxu0 0
      %574 = vmatpush1.bf16.msra.mxu0 0
      %575 = vmatprep.subr.bf16.mxu0 0
      %576 = vmatpush1.bf16.msra.mxu0 0
      %577 = vmatprep.subr.bf16.mxu0 0
      %578 = vmatpush1.bf16.msra.mxu0 0
      %579 = vmatprep.subr.bf16.mxu0 0
      %580 = vmatpush1.bf16.msra.mxu0 0
      %581 = vmatprep.subr.bf16.mxu0 0
      %582 = vmatpush1.bf16.msra.mxu0 0
      %583 = vmatprep.subr.bf16.mxu0 0
      %584 = vmatpush1.bf16.msra.mxu0 0
      %585 = vmatprep.subr.bf16.mxu0 0
      %586 = vmatpush1.bf16.msra.mxu0 0
      %587 = vmatprep.mubr.bf16.mxu0 0
      %588 = vmatmul.mubr.bf16.gmra.mrb[0].mxu0 %v543
      %v589 = vpop.f32.mrb[0].mxu0
      %v590 = vadd.f32 %v489, %v589
      %v591 = vpop.f32.mrb[0].mxu0
      %v592 = vadd.f32 %v489, %v591
      %v593 = vpop.f32.mrb[0].mxu0
      %v594 = vadd.f32 %v494, %v593
      %v595 = vpop.f32.mrb[0].mxu0
      %v596 = vadd.f32 %v494, %v595
      %597 = vdwg.mxu0
      %598 = vmatprep.subr.bf16.mxu0 0
      %599 = vmatpush1.bf16.msra.mxu0 %v528
      %600 = vmatprep.subr.bf16.mxu0 0
      %601 = vmatpush1.bf16.msra.mxu0 %v531
      %602 = vmatprep.subr.bf16.mxu0 0
      %603 = vmatpush1.bf16.msra.mxu0 %v553
      %604 = vmatprep.subr.bf16.mxu0 0
      %605 = vmatpush1.bf16.msra.mxu0 0
      %606 = vmatprep.subr.bf16.mxu0 0
      %607 = vmatpush1.bf16.msra.mxu0 0
      %608 = vmatprep.subr.bf16.mxu0 0
      %609 = vmatpush1.bf16.msra.mxu0 0
      %610 = vmatprep.subr.bf16.mxu0 0
      %611 = vmatpush1.bf16.msra.mxu0 0
      %612 = vmatprep.subr.bf16.mxu0 0
      %613 = vmatpush1.bf16.msra.mxu0 0
      %614 = vmatprep.subr.bf16.mxu0 0
      %615 = vmatpush1.bf16.msra.mxu0 0
      %616 = vmatprep.subr.bf16.mxu0 0
      %617 = vmatpush1.bf16.msra.mxu0 0
      %618 = vmatprep.subr.bf16.mxu0 0
      %619 = vmatpush1.bf16.msra.mxu0 0
      %620 = vmatprep.subr.bf16.mxu0 0
      %621 = vmatpush1.bf16.msra.mxu0 0
      %622 = vmatprep.subr.bf16.mxu0 0
      %623 = vmatpush1.bf16.msra.mxu0 0
      %624 = vmatprep.subr.bf16.mxu0 0
      %625 = vmatpush1.bf16.msra.mxu0 0
      %626 = vmatprep.subr.bf16.mxu0 0
      %627 = vmatpush1.bf16.msra.mxu0 0
      %628 = vmatprep.subr.bf16.mxu0 0
      %629 = vmatpush1.bf16.msra.mxu0 0
      %630 = vmatprep.mubr.bf16.mxu0 0
      %631 = vmatmul.mubr.bf16.gmra.mrb[0].mxu0 %v543
      %v632 = vpop.f32.mrb[0].mxu0
      %v633 = vadd.f32 %v489, %v632
      %v634 = vpop.f32.mrb[0].mxu0
      %v635 = vpop.f32.mrb[0].mxu0
      %v636 = vadd.f32 %v494, %v635
      %v637 = vpop.f32.mrb[0].mxu0
      %638 = vdwg.mxu0
      %v639 = vmax.f32 %v590, 0.0
      %v640 = vmax.f32 %v592, 0.0
      %v641 = vmax.f32 %v633, 0.0
      %v642 = vmax.f32 %v594, 0.0
      %v643 = vmax.f32 %v596, 0.0
      %v644 = vmax.f32 %v636, 0.0
      %v645 = vpack.c.bf16 %v642, %v639
      %v646 = vpack.c.bf16 %v643, %v640
      %v647 = vpack.c.bf16 %v644, %v641
      %v651 = vunpack.c.l.b16 %v645
      %v652 = vunpack.c.l.b16 %v646
      %v653 = vunpack.c.l.b16 %v647
      %v654 = vunpack.c.h.b16 %v645
      %v655 = vunpack.c.h.b16 %v646
      %v656 = vunpack.c.h.b16 %v647
      %v657 = vpack.c.b16 %v652, %v651
      %v658 = vpack.c.b16 %v653, %v653
      %v659 = vpack.c.b16 %v655, %v654
      %v660 = vpack.c.b16 %v656, %v656
      %665 = vst [vmem:[%s192] sm:$0xff] %v657
      %666 = vst [vmem:[%s192 + $0x8] sm:$0xf] %v658
      %667 = vst [vmem:[%s192 + $0xc] sm:$0xff] %v659
      %668 = vst [vmem:[%s192 + $0x14] sm:$0xf] %v660
      %s669 = smul.u32 3, %s19
      %p670 = scmp.lt.s32.totalorder %s18, 1
      %s671 = scalar_select %p670, %s18, 1
      %p672 = scmp.lt.s32.totalorder %s669, 2
      %s673 = scalar_select %p672, %s669, 2
      %s674 = smul.addr %s671, 6
      %s675 = sadd.s32 %s673, %s674
      %s676 = smul.addr %s675, 4
      %s677 = scalar_lea.vmem %s3, %s676
      // Predicated region
      $region33: #{conv_block_forward.1} parent=31 // pred_check
        %p678 = pneg %p114
      $region34: #{conv_block_forward.1} parent=31 // pred_check_branch
        %680 = sbr.rel (%p678) target = $region36
      $region35: #{conv_block_forward.1} parent=31 // pred_region
        %s681 = smul.u32 3, %s19
      $region36: #{conv_block_forward.1} parent=31 // pred_fallthru
        _
    $region32: #{conv_block_forward.1} parent=5 // pred_fallthru
      _
    %p682 = scmp.le.s32.totalorder 2, %s9
    // Predicated region
    $region37: #{conv_block_forward.1} parent=5 // pred_check
      %p683 = pneg %p682
    $region38: #{conv_block_forward.1} parent=5 // pred_check_branch
      %685 = sbr.rel (%p683) target = $region40
    $region39: #{conv_block_forward.1} parent=5 // pred_region
      %s686 = ssub.s32 %s9, 2
      // Predicated region
      $region41: #{conv_block_forward.1} parent=39 // pred_check
        %p687 = pneg %p120
      $region42: #{conv_block_forward.1} parent=39 // pred_check_branch
        %689 = sbr.rel (%p687) target = $region44
      $region43: #{conv_block_forward.1} parent=39 // pred_region
        %s690 = smul.u32 3, %s21
        %p691 = scmp.lt.s32.totalorder %s20, 1
        %s692 = scalar_select %p691, %s20, 1
        %p693 = scmp.lt.s32.totalorder %s690, 2
        %s694 = scalar_select %p693, %s690, 2
        %s695 = smul.addr %s692, 6
        %s696 = sadd.s32 %s694, %s695
        %s697 = smul.addr %s696, 4
        %s698 = scalar_lea.vmem %s3, %s697
      $region44: #{conv_block_forward.1} parent=39 // pred_fallthru
        _
    $region40: #{conv_block_forward.1} parent=5 // pred_fallthru
      _
  $region6: #{conv_block_forward.1} parent=0 // loop_footer
    %s13 = sadd.s32 1, %s9
  $region7: #{conv_block_forward.1} parent=0 // loop_footer_branch
    %8 = sbr.rel target = $region3
  $region8: #{conv_block_forward.1} parent=0 // loop_exit
    _

</llo_original>
